<compile_context>
chip_gen: v7x
topology: tpu7x:2x2x1
jax: 0.10.0
libtpu: 0.0.40
codegen_flags: <defaults>
</compile_context>

<pallas_src>
import jax
import jax.numpy as jnp
from jax.experimental import pallas as pl
from jax.experimental.pallas import tpu as pltpu

INPUT_DIM = 10
ATTENTION_DIM = 5


def _make_kernel(scale):
    def kernel(q_ref, k_ref, v_ref, w_ref, b_ref, out_ref, attw_ref):
        # q_ref/k_ref/v_ref: (B, S, D)
        # w_ref:             (3, D, A)   pre-transposed [Wq.T, Wk.T, Wv.T]
        # b_ref:             (3, 1, A)   [bq, bk, bv]
        # out_ref:           (B, S, A)
        # attw_ref:          (B, S, S)
        wq, wk, wv = w_ref[0], w_ref[1], w_ref[2]
        bq, bk, bv = b_ref[0], b_ref[1], b_ref[2]

        # Three tiny projection matmuls (PyTorch nn.Linear: y = x @ W.T + b; W.T
        # was folded once at parameter-prep time). No diagonal-block slicing.
        q = jnp.einsum("bsd,da->bsa", q_ref[...], wq,
                       preferred_element_type=jnp.float32) + bq
        k = jnp.einsum("bsd,da->bsa", k_ref[...], wk,
                       preferred_element_type=jnp.float32) + bk
        v = jnp.einsum("bsd,da->bsa", v_ref[...], wv,
                       preferred_element_type=jnp.float32) + bv

        # Scaled dot-product attention scores (contract last dims on the MXU).
        scores = jnp.einsum("bqa,bka->bqk", q, k,
                            preferred_element_type=jnp.float32) * scale

        # Numerically-stable softmax over the key axis, exact f32 divide.
        m = jnp.max(scores, axis=-1, keepdims=True)
        e = jnp.exp(scores - m)
        weights = e / jnp.sum(e, axis=-1, keepdims=True)

        out_ref[...] = jnp.einsum("bqk,bka->bqa", weights, v,
                                  preferred_element_type=jnp.float32)
        attw_ref[...] = weights

    return kernel


def prepare_params(params):
    """One-time parameter prep: transpose + stack the three nn.Linear layers.

    params = (wq, bq, wk, bk, wv, bv) with PyTorch-style weights [out, in].
    Returns (w3 [3, D, A], b3 [3, 1, A]) stored as the fused parameters.
    """
    wq, bq, wk, bk, wv, bv = params
    A = wq.shape[0]
    w3 = jnp.stack([wq.T, wk.T, wv.T], axis=0).astype(jnp.float32)       # (3, D, A)
    b3 = jnp.stack([bq, bk, bv], axis=0).reshape(3, 1, A).astype(jnp.float32)
    return w3, b3


def single_head_attention(query, key, value, fused_params):
    """query/key/value: [B, S, INPUT_DIM] float32; fused_params from prepare_params.

    Returns (attention_output [B, S, A], attention_weights [B, S, S]).
    """
    w3, b3 = fused_params
    B, S, D = query.shape
    A = w3.shape[-1]
    scale = 1.0 / (A ** 0.5)  # spec divides scores by attention_dim ** 0.5

    vmem = pl.BlockSpec(memory_space=pltpu.MemorySpace.VMEM)
    out, attw = pl.pallas_call(
        _make_kernel(scale),
        out_shape=(jax.ShapeDtypeStruct((B, S, A), jnp.float32),
                   jax.ShapeDtypeStruct((B, S, S), jnp.float32)),
        in_specs=[vmem, vmem, vmem, vmem, vmem],
        out_specs=(vmem, vmem),
    )(query, key, value, w3, b3)
    return out, attw


def _reference(query, key, value, params):
    wq, bq, wk, bk, wv, bv = params
    Q = query @ wq.T + bq
    K = key @ wk.T + bk
    V = value @ wv.T + bv
    scores = jnp.einsum("bqd,bkd->bqk", Q, K) / (ATTENTION_DIM ** 0.5)
    w = jax.nn.softmax(scores, axis=-1)
    out = jnp.einsum("bqk,bkd->bqd", w, V)
    return out, w


def init_params(key):
    # Deterministic init mimicking nn.Linear's uniform(-1/sqrt(in), 1/sqrt(in)).
    bound = 1.0 / (INPUT_DIM ** 0.5)
    ks = jax.random.split(key, 6)
    wq = jax.random.uniform(ks[0], (ATTENTION_DIM, INPUT_DIM), jnp.float32, -bound, bound)
    bq = jax.random.uniform(ks[1], (ATTENTION_DIM,), jnp.float32, -bound, bound)
    wk = jax.random.uniform(ks[2], (ATTENTION_DIM, INPUT_DIM), jnp.float32, -bound, bound)
    bk = jax.random.uniform(ks[3], (ATTENTION_DIM,), jnp.float32, -bound, bound)
    wv = jax.random.uniform(ks[4], (ATTENTION_DIM, INPUT_DIM), jnp.float32, -bound, bound)
    bv = jax.random.uniform(ks[5], (ATTENTION_DIM,), jnp.float32, -bound, bound)
    return wq, bq, wk, bk, wv, bv


if __name__ == "__main__":
    root = jax.random.PRNGKey(0)
    k_param, k_q, k_k, k_v = jax.random.split(root, 4)

    B, S = 2, 8
    params = init_params(k_param)
    fused = prepare_params(params)  # one-time parameter prep (not per-call)
    jax.block_until_ready(fused)

    query = jax.random.normal(k_q, (B, S, INPUT_DIM), jnp.float32)
    key_in = jax.random.normal(k_k, (B, S, INPUT_DIM), jnp.float32)
    value = jax.random.normal(k_v, (B, S, INPUT_DIM), jnp.float32)

    out, attw = single_head_attention(query, key_in, value, fused)
    jax.block_until_ready((out, attw))

    ref_out, ref_w = _reference(query, key_in, value, params)
    assert jnp.allclose(out, ref_out, atol=1e-5, rtol=1e-5)
    assert jnp.allclose(attw, ref_w, atol=1e-5, rtol=1e-5)

    print("KERNEL_OK")
</pallas_src>

<mosaic_0001>
module attributes {stable_mosaic.version = 11 : i64} {
  func.func @kernel(%arg0: memref<2x8x10xf32, #tpu.memory_space<vmem>>, %arg1: memref<2x8x10xf32, #tpu.memory_space<vmem>>, %arg2: memref<2x8x10xf32, #tpu.memory_space<vmem>>, %arg3: memref<3x10x5xf32, #tpu.memory_space<vmem>>, %arg4: memref<3x1x5xf32, #tpu.memory_space<vmem>>, %arg5: memref<2x8x5xf32, #tpu.memory_space<vmem>>, %arg6: memref<2x8x8xf32, #tpu.memory_space<vmem>>) attributes {dimension_semantics = [], scalar_prefetch = 0 : i64, scratch_operands = 0 : i64, tpu.core_type = #tpu.core_type<tc>} {
    %c0 = arith.constant 0 : index
    %c0_0 = arith.constant 0 : index
    %c0_1 = arith.constant 0 : index
    %0 = vector.load %arg3[%c0, %c0_0, %c0_1] : memref<3x10x5xf32, #tpu.memory_space<vmem>>, vector<1x10x5xf32>
    %1 = vector.shape_cast %0 : vector<1x10x5xf32> to vector<10x5xf32>
    %c1 = arith.constant 1 : index
    %c0_2 = arith.constant 0 : index
    %c0_3 = arith.constant 0 : index
    %2 = vector.load %arg3[%c1, %c0_2, %c0_3] : memref<3x10x5xf32, #tpu.memory_space<vmem>>, vector<1x10x5xf32>
    %3 = vector.shape_cast %2 : vector<1x10x5xf32> to vector<10x5xf32>
    %c2 = arith.constant 2 : index
    %c0_4 = arith.constant 0 : index
    %c0_5 = arith.constant 0 : index
    %4 = vector.load %arg3[%c2, %c0_4, %c0_5] : memref<3x10x5xf32, #tpu.memory_space<vmem>>, vector<1x10x5xf32>
    %5 = vector.shape_cast %4 : vector<1x10x5xf32> to vector<10x5xf32>
    %c0_6 = arith.constant 0 : index
    %c0_7 = arith.constant 0 : index
    %c0_8 = arith.constant 0 : index
    %6 = vector.load %arg4[%c0_6, %c0_7, %c0_8] : memref<3x1x5xf32, #tpu.memory_space<vmem>>, vector<1x1x5xf32>
    %7 = vector.shape_cast %6 : vector<1x1x5xf32> to vector<1x5xf32>
    %c1_9 = arith.constant 1 : index
    %c0_10 = arith.constant 0 : index
    %c0_11 = arith.constant 0 : index
    %8 = vector.load %arg4[%c1_9, %c0_10, %c0_11] : memref<3x1x5xf32, #tpu.memory_space<vmem>>, vector<1x1x5xf32>
    %9 = vector.shape_cast %8 : vector<1x1x5xf32> to vector<1x5xf32>
    %c2_12 = arith.constant 2 : index
    %c0_13 = arith.constant 0 : index
    %c0_14 = arith.constant 0 : index
    %10 = vector.load %arg4[%c2_12, %c0_13, %c0_14] : memref<3x1x5xf32, #tpu.memory_space<vmem>>, vector<1x1x5xf32>
    %11 = vector.shape_cast %10 : vector<1x1x5xf32> to vector<1x5xf32>
    %c0_15 = arith.constant 0 : index
    %c0_16 = arith.constant 0 : index
    %c0_17 = arith.constant 0 : index
    %12 = vector.load %arg0[%c0_15, %c0_16, %c0_17] : memref<2x8x10xf32, #tpu.memory_space<vmem>>, vector<2x8x10xf32>
    "tpu.trace_start"() <{level = 10 : i32, message = "bsd,da->bsa"}> : () -> ()
    %cst = arith.constant dense<0.000000e+00> : vector<2x8x5xf32>
    %13 = tpu.matmul %12, %1, %cst {dimension_numbers = #tpu.dot_dimension_numbers<[2], [0], [0, 1], [1], [0, 0, 0, 1, 1, 1], [], []>} : vector<2x8x10xf32>, vector<10x5xf32>, vector<2x8x5xf32> -> vector<2x8x5xf32>
    "tpu.trace_stop"() : () -> ()
    %14 = vector.shape_cast %7 : vector<1x5xf32> to vector<1x1x5xf32>
    %15 = vector.broadcast %14 : vector<1x1x5xf32> to vector<2x8x5xf32>
    %16 = arith.addf %13, %15 : vector<2x8x5xf32>
    %c0_18 = arith.constant 0 : index
    %c0_19 = arith.constant 0 : index
    %c0_20 = arith.constant 0 : index
    %17 = vector.load %arg1[%c0_18, %c0_19, %c0_20] : memref<2x8x10xf32, #tpu.memory_space<vmem>>, vector<2x8x10xf32>
    "tpu.trace_start"() <{level = 10 : i32, message = "bsd,da->bsa"}> : () -> ()
    %cst_21 = arith.constant dense<0.000000e+00> : vector<2x8x5xf32>
    %18 = tpu.matmul %17, %3, %cst_21 {dimension_numbers = #tpu.dot_dimension_numbers<[2], [0], [0, 1], [1], [0, 0, 0, 1, 1, 1], [], []>} : vector<2x8x10xf32>, vector<10x5xf32>, vector<2x8x5xf32> -> vector<2x8x5xf32>
    "tpu.trace_stop"() : () -> ()
    %19 = vector.shape_cast %9 : vector<1x5xf32> to vector<1x1x5xf32>
    %20 = vector.broadcast %19 : vector<1x1x5xf32> to vector<2x8x5xf32>
    %21 = arith.addf %18, %20 : vector<2x8x5xf32>
    %c0_22 = arith.constant 0 : index
    %c0_23 = arith.constant 0 : index
    %c0_24 = arith.constant 0 : index
    %22 = vector.load %arg2[%c0_22, %c0_23, %c0_24] : memref<2x8x10xf32, #tpu.memory_space<vmem>>, vector<2x8x10xf32>
    "tpu.trace_start"() <{level = 10 : i32, message = "bsd,da->bsa"}> : () -> ()
    %cst_25 = arith.constant dense<0.000000e+00> : vector<2x8x5xf32>
    %23 = tpu.matmul %22, %5, %cst_25 {dimension_numbers = #tpu.dot_dimension_numbers<[2], [0], [0, 1], [1], [0, 0, 0, 1, 1, 1], [], []>} : vector<2x8x10xf32>, vector<10x5xf32>, vector<2x8x5xf32> -> vector<2x8x5xf32>
    "tpu.trace_stop"() : () -> ()
    %24 = vector.shape_cast %11 : vector<1x5xf32> to vector<1x1x5xf32>
    %25 = vector.broadcast %24 : vector<1x1x5xf32> to vector<2x8x5xf32>
    %26 = arith.addf %23, %25 : vector<2x8x5xf32>
    "tpu.trace_start"() <{level = 10 : i32, message = "bqa,bka->bqk"}> : () -> ()
    %cst_26 = arith.constant dense<0.000000e+00> : vector<2x8x8xf32>
    %27 = tpu.matmul %16, %21, %cst_26 {dimension_numbers = #tpu.dot_dimension_numbers<[2], [2], [1], [1], [0, 0, 0, 1, 1, 1], [0], [0]>} : vector<2x8x5xf32>, vector<2x8x5xf32>, vector<2x8x8xf32> -> vector<2x8x8xf32>
    "tpu.trace_stop"() : () -> ()
    %cst_27 = arith.constant 0.44721359 : f32
    %28 = vector.broadcast %cst_27 : f32 to vector<2x8x8xf32>
    %29 = arith.mulf %27, %28 : vector<2x8x8xf32>
    %cst_28 = arith.constant dense<0xFF800000> : vector<2x8xf32>
    %30 = vector.multi_reduction <maximumf>, %29, %cst_28 [2] : vector<2x8x8xf32> to vector<2x8xf32>
    %31 = vector.shape_cast %30 : vector<2x8xf32> to vector<2x8x1xf32>
    %32 = vector.broadcast %31 : vector<2x8x1xf32> to vector<2x8x8xf32>
    %33 = arith.subf %29, %32 : vector<2x8x8xf32>
    %34 = math.exp %33 : vector<2x8x8xf32>
    %cst_29 = arith.constant dense<0.000000e+00> : vector<2x8xf32>
    %35 = vector.multi_reduction <add>, %34, %cst_29 [2] : vector<2x8x8xf32> to vector<2x8xf32>
    %36 = vector.shape_cast %35 : vector<2x8xf32> to vector<2x8x1xf32>
    %37 = vector.broadcast %36 : vector<2x8x1xf32> to vector<2x8x8xf32>
    %38 = arith.divf %34, %37 : vector<2x8x8xf32>
    "tpu.trace_start"() <{level = 10 : i32, message = "bqk,bka->bqa"}> : () -> ()
    %cst_30 = arith.constant dense<0.000000e+00> : vector<2x8x5xf32>
    %39 = tpu.matmul %38, %26, %cst_30 {dimension_numbers = #tpu.dot_dimension_numbers<[2], [1], [1], [2], [0, 0, 0, 1, 1, 2], [0], [0]>} : vector<2x8x8xf32>, vector<2x8x5xf32>, vector<2x8x5xf32> -> vector<2x8x5xf32>
    "tpu.trace_stop"() : () -> ()
    %c0_31 = arith.constant 0 : index
    %c0_32 = arith.constant 0 : index
    %c0_33 = arith.constant 0 : index
    %40 = vector.load %arg5[%c0_31, %c0_32, %c0_33] : memref<2x8x5xf32, #tpu.memory_space<vmem>>, vector<2x8x5xf32>
    tpu.vector_store %arg5[%c0_31, %c0_32, %c0_33], %39 {strides = array<i32>} : memref<2x8x5xf32, #tpu.memory_space<vmem>>, vector<2x8x5xf32>,
    %c0_34 = arith.constant 0 : index
    %c0_35 = arith.constant 0 : index
    %c0_36 = arith.constant 0 : index
    %41 = vector.load %arg6[%c0_34, %c0_35, %c0_36] : memref<2x8x8xf32, #tpu.memory_space<vmem>>, vector<2x8x8xf32>
    tpu.vector_store %arg6[%c0_34, %c0_35, %c0_36], %38 {strides = array<i32>} : memref<2x8x8xf32, #tpu.memory_space<vmem>>, vector<2x8x8xf32>,
    return
  }
}

</mosaic_0001>

<llo_original>
// kernel: tpu_custom_call.1
$region0: #{tpu_custom_call.1}
  #allocation0 [shape = 'u32[]', space=smem, size = 0x4, offset = 0x4, fixed_abs, tag = 'smem constant byte address 0x4 - core index']
  #allocation1 [shape = 'u32[144,128]{1,0:T(1,128)}', space=vmem, size = 0x12000, scoped, tag = 'internal scratch']
  %s0 = inlined_call_operand.vmem [shape: f32[2,8,10], index: 0, kind: input, shape index: {}]
  %s1 = inlined_call_operand.vmem [shape: f32[2,8,10], index: 1, kind: input, shape index: {}]
  %s2 = inlined_call_operand.vmem [shape: f32[2,8,10], index: 2, kind: input, shape index: {}]
  %s3 = inlined_call_operand.vmem [shape: f32[3,10,5], index: 3, kind: input, shape index: {}]
  %s4 = inlined_call_operand.vmem [shape: f32[3,1,5], index: 4, kind: input, shape index: {}]
  %s5 = inlined_call_operand.vmem [shape: f32[2,8,5], index: 5, kind: output, shape index: {0}]
  %s6 = inlined_call_operand.hbm [shape: f32[2,8,8], index: 6, kind: output, shape index: {1}]
  %7 = xla_tuple %s5, %s6
  %s8 = sld [smem:[#allocation0]]
  $region38: #{tpu_custom_call.1} parent=0
    _
  %s10 = ssub.s32 1, %s8
  %s11 = scalar_select 0, %s10, %s8
  $region1: #{tpu_custom_call.1} parent=0
    #allocation2 [shape = 'u8[8192]{0}', space=vmem, size = 0x2000, scoped, tag = 'output window, operand 1, single buffered']
    #allocation3 [shape = 's32[1]{0}', space=sflag, size = 0x4, scoped, tag = 'scoped memory for tpu_custom_call.1']
    %12 = vsyncpa [#allocation3], 0
    // Predicated region
    $region2: #{tpu_custom_call.1} parent=1 // pred_check
      _
    $region3: #{tpu_custom_call.1} parent=1 // pred_check_branch
      %14 = sbr.rel (0) target = $region5
    $region4: #{tpu_custom_call.1} parent=1 // pred_region
      _
    $region5: #{tpu_custom_call.1} parent=1 // pred_fallthru
      _
    // Predicated region
    $region6: #{tpu_custom_call.1} parent=1 // pred_check
      _
    $region7: #{tpu_custom_call.1} parent=1 // pred_check_branch
      %16 = sbr.rel (0) target = $region9
    $region8: #{tpu_custom_call.1} parent=1 // pred_region
      _
    $region9: #{tpu_custom_call.1} parent=1 // pred_fallthru
      _
    // Predicated region
    $region10: #{tpu_custom_call.1} parent=1 // pred_check
      _
    $region11: #{tpu_custom_call.1} parent=1 // pred_check_branch
      %18 = sbr.rel (0) target = $region13
    $region12: #{tpu_custom_call.1} parent=1 // pred_region
      _
    $region13: #{tpu_custom_call.1} parent=1 // pred_fallthru
      _
    // Predicated region
    $region14: #{tpu_custom_call.1} parent=1 // pred_check
      _
    $region15: #{tpu_custom_call.1} parent=1 // pred_check_branch
      %20 = sbr.rel (0) target = $region17
    $region16: #{tpu_custom_call.1} parent=1 // pred_region
      _
    $region17: #{tpu_custom_call.1} parent=1 // pred_fallthru
      _
    // Predicated region
    $region18: #{tpu_custom_call.1} parent=1 // pred_check
      _
    $region19: #{tpu_custom_call.1} parent=1 // pred_check_branch
      %22 = sbr.rel (0) target = $region21
    $region20: #{tpu_custom_call.1} parent=1 // pred_region
      _
    $region21: #{tpu_custom_call.1} parent=1 // pred_fallthru
      _
    %v23 = vld [vmem:[%s3] sm:$0xff]
    %v24 = vld [vmem:[%s3 + $0x8] sm:$0x3]
    %s25 = scalar_lea.vmem %s3, 16
    %v26 = vld [vmem:[%s25] sm:$0xff]
    %v27 = vld [vmem:[%s25 + $0x8] sm:$0x3]
    %s28 = scalar_lea.vmem %s3, 32
    %v29 = vld [vmem:[%s28] sm:$0xff]
    %v30 = vld [vmem:[%s28 + $0x8] sm:$0x3]
    %v31 = vld [vmem:[%s4] sm:$0x1]
    %s32 = scalar_lea.vmem %s4, 1
    %v33 = vld [vmem:[%s32] sm:$0x1]
    %s34 = scalar_lea.vmem %s4, 2
    %v35 = vld [vmem:[%s34] sm:$0x1]
    %v36 = vld [vmem:[%s0] sm:$0xff]
    %v37 = vld [vmem:[%s0 + $0x8] sm:$0xff]
    %v39 = vlaneseq
    %v40 = vshrl.u32 %v39, 7
    %v41 = vsub.s32 0, %v40
    %v42 = vrot.slane %v31, %v41
    %vm44 = vcmask 80896
    %v46 = vsel %vm44, %v36, 0
    %v49 = vsel %vm44, %v37, 0
    %vm51 = vcmask 1041408
    %v53 = vsel %vm51, %v24, 0
    %55 = vmatprep.subr.mxu0 0.0
    %56 = vmatpush1.msra.mxu0 %v23
    %57 = vmatprep.subr.mxu0 0.0
    %58 = vmatpush1.msra.mxu0 %v53
    %59 = vmatprep.subr.mxu0 0.0
    %60 = vmatpush1.msra.mxu0 0.0
    %61 = vmatprep.subr.mxu0 0.0
    %62 = vmatpush1.msra.mxu0 0.0
    %63 = vmatprep.subr.mxu0 0.0
    %64 = vmatpush1.msra.mxu0 0.0
    %65 = vmatprep.subr.mxu0 0.0
    %66 = vmatpush1.msra.mxu0 0.0
    %67 = vmatprep.subr.mxu0 0.0
    %68 = vmatpush1.msra.mxu0 0.0
    %69 = vmatprep.subr.mxu0 0.0
    %70 = vmatpush1.msra.mxu0 0.0
    %71 = vmatprep.subr.mxu0 0.0
    %72 = vmatpush1.msra.mxu0 0.0
    %73 = vmatprep.subr.mxu0 0.0
    %74 = vmatpush1.msra.mxu0 0.0
    %75 = vmatprep.subr.mxu0 0.0
    %76 = vmatpush1.msra.mxu0 0.0
    %77 = vmatprep.subr.mxu0 0.0
    %78 = vmatpush1.msra.mxu0 0.0
    %79 = vmatprep.subr.mxu0 0.0
    %80 = vmatpush1.msra.mxu0 0.0
    %81 = vmatprep.subr.mxu0 0.0
    %82 = vmatpush1.msra.mxu0 0.0
    %83 = vmatprep.subr.mxu0 0.0
    %84 = vmatpush1.msra.mxu0 0.0
    %85 = vmatprep.subr.mxu0 0.0
    %86 = vmatpush1.msra.mxu0 0.0
    %87 = vmatprep.subr.mxu0 0.0
    %88 = vmatpush1.msra.mxu0 0.0
    %89 = vmatprep.subr.mxu0 0.0
    %90 = vmatpush1.msra.mxu0 0.0
    %91 = vmatprep.subr.mxu0 0.0
    %92 = vmatpush1.msra.mxu0 0.0
    %93 = vmatprep.subr.mxu0 0.0
    %94 = vmatpush1.msra.mxu0 0.0
    %95 = vmatprep.subr.mxu0 0.0
    %96 = vmatpush1.msra.mxu0 0.0
    %97 = vmatprep.subr.mxu0 0.0
    %98 = vmatpush1.msra.mxu0 0.0
    %99 = vmatprep.subr.mxu0 0.0
    %100 = vmatpush1.msra.mxu0 0.0
    %101 = vmatprep.subr.mxu0 0.0
    %102 = vmatpush1.msra.mxu0 0.0
    %103 = vmatprep.subr.mxu0 0.0
    %104 = vmatpush1.msra.mxu0 0.0
    %105 = vmatprep.subr.mxu0 0.0
    %106 = vmatpush1.msra.mxu0 0.0
    %107 = vmatprep.subr.mxu0 0.0
    %108 = vmatpush1.msra.mxu0 0.0
    %109 = vmatprep.subr.mxu0 0.0
    %110 = vmatpush1.msra.mxu0 0.0
    %111 = vmatprep.subr.mxu0 0.0
    %112 = vmatpush1.msra.mxu0 0.0
    %113 = vmatprep.subr.mxu0 0.0
    %114 = vmatpush1.msra.mxu0 0.0
    %115 = vmatprep.subr.mxu0 0.0
    %116 = vmatpush1.msra.mxu0 0.0
    %117 = vmatprep.subr.mxu0 0.0
    %118 = vmatpush1.msra.mxu0 0.0
    %119 = vmatprep.mubr.f32.mxu0 0.0
    %120 = vmatmul.mubr.f32.gmra.mrb[0].mxu0 %v46
    %v121 = vpop.f32.mrb[0].mxu0
    %v122 = vadd.f32 %v42, %v121
    %v123 = vpop.f32.mrb[0].mxu0
    %124 = vmatprep.mubr.f32.mxu0 0.0
    %125 = vmatmul.mubr.f32.gmra.mrb[0].mxu0 %v49
    %v126 = vpop.f32.mrb[0].mxu0
    %v127 = vadd.f32 %v42, %v126
    %v128 = vpop.f32.mrb[0].mxu0
    %129 = vdwg.mxu0
    %v130 = vld [vmem:[%s1] sm:$0xff]
    %v131 = vld [vmem:[%s1 + $0x8] sm:$0xff]
    %v133 = vlaneseq
    %v134 = vshrl.u32 %v133, 7
    %v135 = vsub.s32 0, %v134
    %v136 = vrot.slane %v33, %v135
    %v139 = vsel %vm44, %v130, 0
    %v142 = vsel %vm44, %v131, 0
    %v145 = vsel %vm51, %v27, 0
    %147 = vmatprep.subr.mxu0 0.0
    %148 = vmatpush1.msra.mxu0 %v26
    %149 = vmatprep.subr.mxu0 0.0
    %150 = vmatpush1.msra.mxu0 %v145
    %151 = vmatprep.subr.mxu0 0.0
    %152 = vmatpush1.msra.mxu0 0.0
    %153 = vmatprep.subr.mxu0 0.0
    %154 = vmatpush1.msra.mxu0 0.0
    %155 = vmatprep.subr.mxu0 0.0
    %156 = vmatpush1.msra.mxu0 0.0
    %157 = vmatprep.subr.mxu0 0.0
    %158 = vmatpush1.msra.mxu0 0.0
    %159 = vmatprep.subr.mxu0 0.0
    %160 = vmatpush1.msra.mxu0 0.0
    %161 = vmatprep.subr.mxu0 0.0
    %162 = vmatpush1.msra.mxu0 0.0
    %163 = vmatprep.subr.mxu0 0.0
    %164 = vmatpush1.msra.mxu0 0.0
    %165 = vmatprep.subr.mxu0 0.0
    %166 = vmatpush1.msra.mxu0 0.0
    %167 = vmatprep.subr.mxu0 0.0
    %168 = vmatpush1.msra.mxu0 0.0
    %169 = vmatprep.subr.mxu0 0.0
    %170 = vmatpush1.msra.mxu0 0.0
    %171 = vmatprep.subr.mxu0 0.0
    %172 = vmatpush1.msra.mxu0 0.0
    %173 = vmatprep.subr.mxu0 0.0
    %174 = vmatpush1.msra.mxu0 0.0
    %175 = vmatprep.subr.mxu0 0.0
    %176 = vmatpush1.msra.mxu0 0.0
    %177 = vmatprep.subr.mxu0 0.0
    %178 = vmatpush1.msra.mxu0 0.0
    %179 = vmatprep.subr.mxu0 0.0
    %180 = vmatpush1.msra.mxu0 0.0
    %181 = vmatprep.subr.mxu0 0.0
    %182 = vmatpush1.msra.mxu0 0.0
    %183 = vmatprep.subr.mxu0 0.0
    %184 = vmatpush1.msra.mxu0 0.0
    %185 = vmatprep.subr.mxu0 0.0
    %186 = vmatpush1.msra.mxu0 0.0
    %187 = vmatprep.subr.mxu0 0.0
    %188 = vmatpush1.msra.mxu0 0.0
    %189 = vmatprep.subr.mxu0 0.0
    %190 = vmatpush1.msra.mxu0 0.0
    %191 = vmatprep.subr.mxu0 0.0
    %192 = vmatpush1.msra.mxu0 0.0
    %193 = vmatprep.subr.mxu0 0.0
    %194 = vmatpush1.msra.mxu0 0.0
    %195 = vmatprep.subr.mxu0 0.0
    %196 = vmatpush1.msra.mxu0 0.0
    %197 = vmatprep.subr.mxu0 0.0
    %198 = vmatpush1.msra.mxu0 0.0
    %199 = vmatprep.subr.mxu0 0.0
    %200 = vmatpush1.msra.mxu0 0.0
    %201 = vmatprep.subr.mxu0 0.0
    %202 = vmatpush1.msra.mxu0 0.0
    %203 = vmatprep.subr.mxu0 0.0
    %204 = vmatpush1.msra.mxu0 0.0
    %205 = vmatprep.subr.mxu0 0.0
    %206 = vmatpush1.msra.mxu0 0.0
    %207 = vmatprep.subr.mxu0 0.0
    %208 = vmatpush1.msra.mxu0 0.0
    %209 = vmatprep.subr.mxu0 0.0
    %210 = vmatpush1.msra.mxu0 0.0
    %211 = vmatprep.mubr.f32.mxu0 0.0
    %212 = vmatmul.mubr.f32.gmra.mrb[0].mxu0 %v139
    %v213 = vpop.f32.mrb[0].mxu0
    %v214 = vadd.f32 %v136, %v213
    %v215 = vpop.f32.mrb[0].mxu0
    %216 = vmatprep.mubr.f32.mxu0 0.0
    %217 = vmatmul.mubr.f32.gmra.mrb[0].mxu0 %v142
    %v218 = vpop.f32.mrb[0].mxu0
    %v219 = vadd.f32 %v136, %v218
    %v220 = vpop.f32.mrb[0].mxu0
    %221 = vdwg.mxu0
    %v222 = vld [vmem:[%s2] sm:$0xff]
    %v223 = vld [vmem:[%s2 + $0x8] sm:$0xff]
    %v225 = vlaneseq
    %v226 = vshrl.u32 %v225, 7
    %v227 = vsub.s32 0, %v226
    %v228 = vrot.slane %v35, %v227
    %v231 = vsel %vm44, %v222, 0
    %v234 = vsel %vm44, %v223, 0
    %v237 = vsel %vm51, %v30, 0
    %239 = vmatprep.subr.mxu0 0.0
    %240 = vmatpush1.msra.mxu0 %v29
    %241 = vmatprep.subr.mxu0 0.0
    %242 = vmatpush1.msra.mxu0 %v237
    %243 = vmatprep.subr.mxu0 0.0
    %244 = vmatpush1.msra.mxu0 0.0
    %245 = vmatprep.subr.mxu0 0.0
    %246 = vmatpush1.msra.mxu0 0.0
    %247 = vmatprep.subr.mxu0 0.0
    %248 = vmatpush1.msra.mxu0 0.0
    %249 = vmatprep.subr.mxu0 0.0
    %250 = vmatpush1.msra.mxu0 0.0
    %251 = vmatprep.subr.mxu0 0.0
    %252 = vmatpush1.msra.mxu0 0.0
    %253 = vmatprep.subr.mxu0 0.0
    %254 = vmatpush1.msra.mxu0 0.0
    %255 = vmatprep.subr.mxu0 0.0
    %256 = vmatpush1.msra.mxu0 0.0
    %257 = vmatprep.subr.mxu0 0.0
    %258 = vmatpush1.msra.mxu0 0.0
    %259 = vmatprep.subr.mxu0 0.0
    %260 = vmatpush1.msra.mxu0 0.0
    %261 = vmatprep.subr.mxu0 0.0
    %262 = vmatpush1.msra.mxu0 0.0
    %263 = vmatprep.subr.mxu0 0.0
    %264 = vmatpush1.msra.mxu0 0.0
    %265 = vmatprep.subr.mxu0 0.0
    %266 = vmatpush1.msra.mxu0 0.0
    %267 = vmatprep.subr.mxu0 0.0
    %268 = vmatpush1.msra.mxu0 0.0
    %269 = vmatprep.subr.mxu0 0.0
    %270 = vmatpush1.msra.mxu0 0.0
    %271 = vmatprep.subr.mxu0 0.0
    %272 = vmatpush1.msra.mxu0 0.0
    %273 = vmatprep.subr.mxu0 0.0
    %274 = vmatpush1.msra.mxu0 0.0
    %275 = vmatprep.subr.mxu0 0.0
    %276 = vmatpush1.msra.mxu0 0.0
    %277 = vmatprep.subr.mxu0 0.0
    %278 = vmatpush1.msra.mxu0 0.0
    %279 = vmatprep.subr.mxu0 0.0
    %280 = vmatpush1.msra.mxu0 0.0
    %281 = vmatprep.subr.mxu0 0.0
    %282 = vmatpush1.msra.mxu0 0.0
    %283 = vmatprep.subr.mxu0 0.0
    %284 = vmatpush1.msra.mxu0 0.0
    %285 = vmatprep.subr.mxu0 0.0
    %286 = vmatpush1.msra.mxu0 0.0
    %287 = vmatprep.subr.mxu0 0.0
    %288 = vmatpush1.msra.mxu0 0.0
    %289 = vmatprep.subr.mxu0 0.0
    %290 = vmatpush1.msra.mxu0 0.0
    %291 = vmatprep.subr.mxu0 0.0
    %292 = vmatpush1.msra.mxu0 0.0
    %293 = vmatprep.subr.mxu0 0.0
    %294 = vmatpush1.msra.mxu0 0.0
    %295 = vmatprep.subr.mxu0 0.0
    %296 = vmatpush1.msra.mxu0 0.0
    %297 = vmatprep.subr.mxu0 0.0
    %298 = vmatpush1.msra.mxu0 0.0
    %299 = vmatprep.subr.mxu0 0.0
    %300 = vmatpush1.msra.mxu0 0.0
    %301 = vmatprep.subr.mxu0 0.0
    %302 = vmatpush1.msra.mxu0 0.0
    %303 = vmatprep.mubr.f32.mxu0 0.0
    %304 = vmatmul.mubr.f32.gmra.mrb[0].mxu0 %v231
    %v305 = vpop.f32.mrb[0].mxu0
    %v306 = vadd.f32 %v228, %v305
    %v307 = vpop.f32.mrb[0].mxu0
    %308 = vmatprep.mubr.f32.mxu0 0.0
    %309 = vmatmul.mubr.f32.gmra.mrb[0].mxu0 %v234
    %v310 = vpop.f32.mrb[0].mxu0
    %v311 = vadd.f32 %v228, %v310
    %v312 = vpop.f32.mrb[0].mxu0
    %313 = vdwg.mxu0
    %vm314 = vcmask 39936
    %v316 = vsel %vm314, %v122, 0
    %v319 = vsel %vm314, %v214, 0
    %321 = vmatprep.subr.mxu0 0.0
    %322 = vmatpush1.xpose.msra.mxu0 %v319
    %323 = vmatprep.subr.mxu0 0.0
    %324 = vmatpush1.xpose.msra.mxu0 0.0
    %325 = vmatprep.subr.mxu0 0.0
    %326 = vmatpush1.xpose.msra.mxu0 0.0
    %327 = vmatprep.subr.mxu0 0.0
    %328 = vmatpush1.xpose.msra.mxu0 0.0
    %329 = vmatprep.subr.mxu0 0.0
    %330 = vmatpush1.xpose.msra.mxu0 0.0
    %331 = vmatprep.subr.mxu0 0.0
    %332 = vmatpush1.xpose.msra.mxu0 0.0
    %333 = vmatprep.subr.mxu0 0.0
    %334 = vmatpush1.xpose.msra.mxu0 0.0
    %335 = vmatprep.subr.mxu0 0.0
    %336 = vmatpush1.xpose.msra.mxu0 0.0
    %337 = vmatprep.subr.mxu0 0.0
    %338 = vmatpush1.xpose.msra.mxu0 0.0
    %339 = vmatprep.subr.mxu0 0.0
    %340 = vmatpush1.xpose.msra.mxu0 0.0
    %341 = vmatprep.subr.mxu0 0.0
    %342 = vmatpush1.xpose.msra.mxu0 0.0
    %343 = vmatprep.subr.mxu0 0.0
    %344 = vmatpush1.xpose.msra.mxu0 0.0
    %345 = vmatprep.subr.mxu0 0.0
    %346 = vmatpush1.xpose.msra.mxu0 0.0
    %347 = vmatprep.subr.mxu0 0.0
    %348 = vmatpush1.xpose.msra.mxu0 0.0
    %349 = vmatprep.subr.mxu0 0.0
    %350 = vmatpush1.xpose.msra.mxu0 0.0
    %351 = vmatprep.subr.mxu0 0.0
    %352 = vmatpush1.xpose.msra.mxu0 0.0
    %353 = vmatprep.subr.mxu0 0.0
    %354 = vmatpush1.xpose.msra.mxu0 0.0
    %355 = vmatprep.subr.mxu0 0.0
    %356 = vmatpush1.xpose.msra.mxu0 0.0
    %357 = vmatprep.subr.mxu0 0.0
    %358 = vmatpush1.xpose.msra.mxu0 0.0
    %359 = vmatprep.subr.mxu0 0.0
    %360 = vmatpush1.xpose.msra.mxu0 0.0
    %361 = vmatprep.subr.mxu0 0.0
    %362 = vmatpush1.xpose.msra.mxu0 0.0
    %363 = vmatprep.subr.mxu0 0.0
    %364 = vmatpush1.xpose.msra.mxu0 0.0
    %365 = vmatprep.subr.mxu0 0.0
    %366 = vmatpush1.xpose.msra.mxu0 0.0
    %367 = vmatprep.subr.mxu0 0.0
    %368 = vmatpush1.xpose.msra.mxu0 0.0
    %369 = vmatprep.subr.mxu0 0.0
    %370 = vmatpush1.xpose.msra.mxu0 0.0
    %371 = vmatprep.subr.mxu0 0.0
    %372 = vmatpush1.xpose.msra.mxu0 0.0
    %373 = vmatprep.subr.mxu0 0.0
    %374 = vmatpush1.xpose.msra.mxu0 0.0
    %375 = vmatprep.subr.mxu0 0.0
    %376 = vmatpush1.xpose.msra.mxu0 0.0
    %377 = vmatprep.subr.mxu0 0.0
    %378 = vmatpush1.xpose.msra.mxu0 0.0
    %379 = vmatprep.subr.mxu0 0.0
    %380 = vmatpush1.xpose.msra.mxu0 0.0
    %381 = vmatprep.subr.mxu0 0.0
    %382 = vmatpush1.xpose.msra.mxu0 0.0
    %383 = vmatprep.subr.mxu0 0.0
    %384 = vmatpush1.xpose.msra.mxu0 0.0
    %385 = vmatprep.mubr.f32.mxu0 0.0
    %386 = vmatmul.mubr.f32.gmra.mrb[0].mxu0 %v316
    %v387 = vpop.f32.mrb[0].mxu0
    %v388 = vadd.f32 0.0, %v387
    %v389 = vpop.f32.mrb[0].mxu0
    %390 = vdwg.mxu0
    %v392 = vsel %vm314, %v127, 0
    %v395 = vsel %vm314, %v219, 0
    %397 = vmatprep.subr.mxu0 0.0
    %398 = vmatpush1.xpose.msra.mxu0 %v395
    %399 = vmatprep.subr.mxu0 0.0
    %400 = vmatpush1.xpose.msra.mxu0 0.0
    %401 = vmatprep.subr.mxu0 0.0
    %402 = vmatpush1.xpose.msra.mxu0 0.0
    %403 = vmatprep.subr.mxu0 0.0
    %404 = vmatpush1.xpose.msra.mxu0 0.0
    %405 = vmatprep.subr.mxu0 0.0
    %406 = vmatpush1.xpose.msra.mxu0 0.0
    %407 = vmatprep.subr.mxu0 0.0
    %408 = vmatpush1.xpose.msra.mxu0 0.0
    %409 = vmatprep.subr.mxu0 0.0
    %410 = vmatpush1.xpose.msra.mxu0 0.0
    %411 = vmatprep.subr.mxu0 0.0
    %412 = vmatpush1.xpose.msra.mxu0 0.0
    %413 = vmatprep.subr.mxu0 0.0
    %414 = vmatpush1.xpose.msra.mxu0 0.0
    %415 = vmatprep.subr.mxu0 0.0
    %416 = vmatpush1.xpose.msra.mxu0 0.0
    %417 = vmatprep.subr.mxu0 0.0
    %418 = vmatpush1.xpose.msra.mxu0 0.0
    %419 = vmatprep.subr.mxu0 0.0
    %420 = vmatpush1.xpose.msra.mxu0 0.0
    %421 = vmatprep.subr.mxu0 0.0
    %422 = vmatpush1.xpose.msra.mxu0 0.0
    %423 = vmatprep.subr.mxu0 0.0
    %424 = vmatpush1.xpose.msra.mxu0 0.0
    %425 = vmatprep.subr.mxu0 0.0
    %426 = vmatpush1.xpose.msra.mxu0 0.0
    %427 = vmatprep.subr.mxu0 0.0
    %428 = vmatpush1.xpose.msra.mxu0 0.0
    %429 = vmatprep.subr.mxu0 0.0
    %430 = vmatpush1.xpose.msra.mxu0 0.0
    %431 = vmatprep.subr.mxu0 0.0
    %432 = vmatpush1.xpose.msra.mxu0 0.0
    %433 = vmatprep.subr.mxu0 0.0
    %434 = vmatpush1.xpose.msra.mxu0 0.0
    %435 = vmatprep.subr.mxu0 0.0
    %436 = vmatpush1.xpose.msra.mxu0 0.0
    %437 = vmatprep.subr.mxu0 0.0
    %438 = vmatpush1.xpose.msra.mxu0 0.0
    %439 = vmatprep.subr.mxu0 0.0
    %440 = vmatpush1.xpose.msra.mxu0 0.0
    %441 = vmatprep.subr.mxu0 0.0
    %442 = vmatpush1.xpose.msra.mxu0 0.0
    %443 = vmatprep.subr.mxu0 0.0
    %444 = vmatpush1.xpose.msra.mxu0 0.0
    %445 = vmatprep.subr.mxu0 0.0
    %446 = vmatpush1.xpose.msra.mxu0 0.0
    %447 = vmatprep.subr.mxu0 0.0
    %448 = vmatpush1.xpose.msra.mxu0 0.0
    %449 = vmatprep.subr.mxu0 0.0
    %450 = vmatpush1.xpose.msra.mxu0 0.0
    %451 = vmatprep.subr.mxu0 0.0
    %452 = vmatpush1.xpose.msra.mxu0 0.0
    %453 = vmatprep.subr.mxu0 0.0
    %454 = vmatpush1.xpose.msra.mxu0 0.0
    %455 = vmatprep.subr.mxu0 0.0
    %456 = vmatpush1.xpose.msra.mxu0 0.0
    %457 = vmatprep.subr.mxu0 0.0
    %458 = vmatpush1.xpose.msra.mxu0 0.0
    %459 = vmatprep.subr.mxu0 0.0
    %460 = vmatpush1.xpose.msra.mxu0 0.0
    %461 = vmatprep.mubr.f32.mxu0 0.0
    %462 = vmatmul.mubr.f32.gmra.mrb[0].mxu0 %v392
    %v463 = vpop.f32.mrb[0].mxu0
    %v464 = vadd.f32 0.0, %v463
    %v465 = vpop.f32.mrb[0].mxu0
    %466 = vdwg.mxu0
    %v467 = vmul.f32 %v388, 0.4472136
    %v468 = vmul.f32 %v464, 0.4472136
    %vm469 = vcmask 64512
    %v470 = vsel %vm469, %v467, -inf
    %471 = vmax.xlane.f32.xlu0 %v470
    %v472 = vpop.xlane.xlu0 %471
    %v473 = vsel %vm469, %v468, -inf
    %474 = vmax.xlane.f32.xlu0 %v473
    %v475 = vpop.xlane.xlu0 %474
    %v476 = vsub.f32 %v467, %v472
    %v477 = vsub.f32 %v468, %v475
    %v478 = vmul.f32 %v476, 1.442695
    %v479 = vpow.pop %v478
    %v480 = vmul.f32 %v477, 1.442695
    %v481 = vpow.pop %v480
    %v482 = vsel %vm469, %v479, 0.0
    %483 = vadd.xlane.f32.xlu0 %v482
    %v484 = vpop.xlane.xlu0 %483
    %v485 = vsel %vm469, %v481, 0.0
    %486 = vadd.xlane.f32.xlu0 %v485
    %v487 = vpop.xlane.xlu0 %486
    %v488 = vrcp.pop %v484
    %v489 = vmul.f32 %v479, %v488
    %v490 = vrcp.pop %v487
    %v491 = vmul.f32 %v481, %v490
    %v493 = vsel %vm469, %v489, 0
    %495 = vmatprep.subr.mxu0 0.0
    %496 = vmatpush1.msra.mxu0 %v306
    %497 = vmatprep.subr.mxu0 0.0
    %498 = vmatpush1.msra.mxu0 0.0
    %499 = vmatprep.subr.mxu0 0.0
    %500 = vmatpush1.msra.mxu0 0.0
    %501 = vmatprep.subr.mxu0 0.0
    %502 = vmatpush1.msra.mxu0 0.0
    %503 = vmatprep.subr.mxu0 0.0
    %504 = vmatpush1.msra.mxu0 0.0
    %505 = vmatprep.subr.mxu0 0.0
    %506 = vmatpush1.msra.mxu0 0.0
    %507 = vmatprep.subr.mxu0 0.0
    %508 = vmatpush1.msra.mxu0 0.0
    %509 = vmatprep.subr.mxu0 0.0
    %510 = vmatpush1.msra.mxu0 0.0
    %511 = vmatprep.subr.mxu0 0.0
    %512 = vmatpush1.msra.mxu0 0.0
    %513 = vmatprep.subr.mxu0 0.0
    %514 = vmatpush1.msra.mxu0 0.0
    %515 = vmatprep.subr.mxu0 0.0
    %516 = vmatpush1.msra.mxu0 0.0
    %517 = vmatprep.subr.mxu0 0.0
    %518 = vmatpush1.msra.mxu0 0.0
    %519 = vmatprep.subr.mxu0 0.0
    %520 = vmatpush1.msra.mxu0 0.0
    %521 = vmatprep.subr.mxu0 0.0
    %522 = vmatpush1.msra.mxu0 0.0
    %523 = vmatprep.subr.mxu0 0.0
    %524 = vmatpush1.msra.mxu0 0.0
    %525 = vmatprep.subr.mxu0 0.0
    %526 = vmatpush1.msra.mxu0 0.0
    %527 = vmatprep.subr.mxu0 0.0
    %528 = vmatpush1.msra.mxu0 0.0
    %529 = vmatprep.subr.mxu0 0.0
    %530 = vmatpush1.msra.mxu0 0.0
    %531 = vmatprep.subr.mxu0 0.0
    %532 = vmatpush1.msra.mxu0 0.0
    %533 = vmatprep.subr.mxu0 0.0
    %534 = vmatpush1.msra.mxu0 0.0
    %535 = vmatprep.subr.mxu0 0.0
    %536 = vmatpush1.msra.mxu0 0.0
    %537 = vmatprep.subr.mxu0 0.0
    %538 = vmatpush1.msra.mxu0 0.0
    %539 = vmatprep.subr.mxu0 0.0
    %540 = vmatpush1.msra.mxu0 0.0
    %541 = vmatprep.subr.mxu0 0.0
    %542 = vmatpush1.msra.mxu0 0.0
    %543 = vmatprep.subr.mxu0 0.0
    %544 = vmatpush1.msra.mxu0 0.0
    %545 = vmatprep.subr.mxu0 0.0
    %546 = vmatpush1.msra.mxu0 0.0
    %547 = vmatprep.subr.mxu0 0.0
    %548 = vmatpush1.msra.mxu0 0.0
    %549 = vmatprep.subr.mxu0 0.0
    %550 = vmatpush1.msra.mxu0 0.0
    %551 = vmatprep.subr.mxu0 0.0
    %552 = vmatpush1.msra.mxu0 0.0
    %553 = vmatprep.subr.mxu0 0.0
    %554 = vmatpush1.msra.mxu0 0.0
    %555 = vmatprep.subr.mxu0 0.0
    %556 = vmatpush1.msra.mxu0 0.0
    %557 = vmatprep.subr.mxu0 0.0
    %558 = vmatpush1.msra.mxu0 0.0
    %559 = vmatprep.mubr.f32.mxu0 0.0
    %560 = vmatmul.mubr.f32.gmra.mrb[0].mxu0 %v493
    %v561 = vpop.f32.mrb[0].mxu0
    %v562 = vadd.f32 0.0, %v561
    %v563 = vpop.f32.mrb[0].mxu0
    %564 = vdwg.mxu0
    %v566 = vsel %vm469, %v491, 0
    %568 = vmatprep.subr.mxu0 0.0
    %569 = vmatpush1.msra.mxu0 %v311
    %570 = vmatprep.subr.mxu0 0.0
    %571 = vmatpush1.msra.mxu0 0.0
    %572 = vmatprep.subr.mxu0 0.0
    %573 = vmatpush1.msra.mxu0 0.0
    %574 = vmatprep.subr.mxu0 0.0
    %575 = vmatpush1.msra.mxu0 0.0
    %576 = vmatprep.subr.mxu0 0.0
    %577 = vmatpush1.msra.mxu0 0.0
    %578 = vmatprep.subr.mxu0 0.0
    %579 = vmatpush1.msra.mxu0 0.0
    %580 = vmatprep.subr.mxu0 0.0
    %581 = vmatpush1.msra.mxu0 0.0
    %582 = vmatprep.subr.mxu0 0.0
    %583 = vmatpush1.msra.mxu0 0.0
    %584 = vmatprep.subr.mxu0 0.0
    %585 = vmatpush1.msra.mxu0 0.0
    %586 = vmatprep.subr.mxu0 0.0
    %587 = vmatpush1.msra.mxu0 0.0
    %588 = vmatprep.subr.mxu0 0.0
    %589 = vmatpush1.msra.mxu0 0.0
    %590 = vmatprep.subr.mxu0 0.0
    %591 = vmatpush1.msra.mxu0 0.0
    %592 = vmatprep.subr.mxu0 0.0
    %593 = vmatpush1.msra.mxu0 0.0
    %594 = vmatprep.subr.mxu0 0.0
    %595 = vmatpush1.msra.mxu0 0.0
    %596 = vmatprep.subr.mxu0 0.0
    %597 = vmatpush1.msra.mxu0 0.0
    %598 = vmatprep.subr.mxu0 0.0
    %599 = vmatpush1.msra.mxu0 0.0
    %600 = vmatprep.subr.mxu0 0.0
    %601 = vmatpush1.msra.mxu0 0.0
    %602 = vmatprep.subr.mxu0 0.0
    %603 = vmatpush1.msra.mxu0 0.0
    %604 = vmatprep.subr.mxu0 0.0
    %605 = vmatpush1.msra.mxu0 0.0
    %606 = vmatprep.subr.mxu0 0.0
    %607 = vmatpush1.msra.mxu0 0.0
    %608 = vmatprep.subr.mxu0 0.0
    %609 = vmatpush1.msra.mxu0 0.0
    %610 = vmatprep.subr.mxu0 0.0
    %611 = vmatpush1.msra.mxu0 0.0
    %612 = vmatprep.subr.mxu0 0.0
    %613 = vmatpush1.msra.mxu0 0.0
    %614 = vmatprep.subr.mxu0 0.0
    %615 = vmatpush1.msra.mxu0 0.0
    %616 = vmatprep.subr.mxu0 0.0
    %617 = vmatpush1.msra.mxu0 0.0
    %618 = vmatprep.subr.mxu0 0.0
    %619 = vmatpush1.msra.mxu0 0.0
    %620 = vmatprep.subr.mxu0 0.0
    %621 = vmatpush1.msra.mxu0 0.0
    %622 = vmatprep.subr.mxu0 0.0
    %623 = vmatpush1.msra.mxu0 0.0
    %624 = vmatprep.subr.mxu0 0.0
    %625 = vmatpush1.msra.mxu0 0.0
    %626 = vmatprep.subr.mxu0 0.0
    %627 = vmatpush1.msra.mxu0 0.0
    %628 = vmatprep.subr.mxu0 0.0
    %629 = vmatpush1.msra.mxu0 0.0
    %630 = vmatprep.subr.mxu0 0.0
    %631 = vmatpush1.msra.mxu0 0.0
    %632 = vmatprep.mubr.f32.mxu0 0.0
    %633 = vmatmul.mubr.f32.gmra.mrb[0].mxu0 %v566
    %v634 = vpop.f32.mrb[0].mxu0
    %v635 = vadd.f32 0.0, %v634
    %v636 = vpop.f32.mrb[0].mxu0
    %637 = vdwg.mxu0
    %638 = vst.msk [vmem:[%s5] sm:$0xff] %vm314, %v562
    %639 = vst.msk [vmem:[%s5 + $0x8] sm:$0xff] %vm314, %v635
    %640 = vst.msk [vmem:[#allocation2] sm:$0xff] %vm469, %v489
    %641 = vst.msk [vmem:[#allocation2 + $0x8] sm:$0xff] %vm469, %v491
    // Predicated region
    $region22: #{tpu_custom_call.1} parent=1 // pred_check
      _
    $region23: #{tpu_custom_call.1} parent=1 // pred_check_branch
      %643 = sbr.rel (0) target = $region25
    $region24: #{tpu_custom_call.1} parent=1 // pred_region
      _
    $region25: #{tpu_custom_call.1} parent=1 // pred_fallthru
      _
    // Predicated region
    $region26: #{tpu_custom_call.1} parent=1 // pred_check
      _
    $region27: #{tpu_custom_call.1} parent=1 // pred_check_branch
      %645 = sbr.rel (0) target = $region29
    $region28: #{tpu_custom_call.1} parent=1 // pred_region
      %s647 = ssub.s32 256, 256
      %648 = vsyncadd [#allocation3], %s647
      %s649 = sshll.u32 [#allocation2], 4
      %s650 = int_to_ptr.vmem [resolvable:$true] %s649
      %655 = dma.vmem_to_hbm [thread:$0]  %s650, 256, %s6, [#allocation3], 128, 128, 8
    $region29: #{tpu_custom_call.1} parent=1 // pred_fallthru
      _
    // Predicated region
    $region30: #{tpu_custom_call.1} parent=1 // pred_check
      _
    $region31: #{tpu_custom_call.1} parent=1 // pred_check_branch
      %657 = sbr.rel (0) target = $region33
    $region32: #{tpu_custom_call.1} parent=1 // pred_region
      _
    $region33: #{tpu_custom_call.1} parent=1 // pred_fallthru
      _
    // Predicated region
    $region34: #{tpu_custom_call.1} parent=1 // pred_check
      _
    $region35: #{tpu_custom_call.1} parent=1 // pred_check_branch
      %659 = sbr.rel (0) target = $region37
    $region36: #{tpu_custom_call.1} parent=1 // pred_region
      %660 = dma.done [#allocation3], 256
    $region37: #{tpu_custom_call.1} parent=1 // pred_fallthru
      _
    %661 = vsyncpa [#allocation3], 1

</llo_original>
